<compile_context>
chip_gen: v6e
topology: v6e:2x2x1
jax: 0.10.0
libtpu: 0.0.40
codegen_flags: <defaults>
</compile_context>

<pallas_src>
import jax
import jax.numpy as jnp
from jax.experimental import pallas as pl
from jax.experimental.pallas import tpu as pltpu


def _actor_critic_kernel(params_ref, streams_ref, scalars_ref, out_ref, action_ref):
    """One lane-dense batch tile.

    streams_ref : [3A, TB]  rows [0:A)=w_values, [A:2A)=probabilities, [2A:3A)=rand_rew
    scalars_ref : [2,  TB]  row 0 = v_values, row 1 = u (per-trial uniform for sampling)
    out_ref     : [3A, TB]  rows [0:A)=policy, [A:2A)=rewards, [2A:3A)=prediction_errors
    action_ref  : [1,  TB]  int32 sampled action index
    """
    f32 = jnp.float32
    inv_temp = params_ref[0]            # 1 / temperature   (SMEM scalar)
    feedback = params_ref[1]            # feedback          (SMEM scalar)
    # TODO(synk): reward_valence() body not provided; params_ref[2] (valence_factor) is
    #             carried but intentionally not applied.

    A = streams_ref.shape[0] // 3
    s = streams_ref[...].astype(f32)                       # single full-tile load
    w, prob, rand = s[0:A, :], s[A:2 * A, :], s[2 * A:3 * A, :]

    sc = scalars_ref[...].astype(f32)
    v, u = sc[0:1, :], sc[1:2, :]

    # ---- get_reward: reward_i = int(rand_i < prob_i) * feedback --------------------------
    rewards = (rand < prob).astype(f32) * feedback

    # ---- select_action: numerically-stable softmax over the (tiny) action sublane axis ---
    x = w * inv_temp
    x = x - jnp.max(x, axis=0, keepdims=True)               # stability (XLU sublane reduce)
    z = jnp.exp(x)                                          # EUP
    policy = z / jnp.sum(z, axis=0, keepdims=True)          # exact divide: kernel is DMA-bound

    # Inverse-CDF sample, fully vectorized:
    #   action = #{ j : cumsum_j(policy) < u }, clamped to A-1  (== first index with cumsum >= u)
    # Inclusive prefix sum via a log-depth shift-and-add scan (full-vreg adds, no per-row
    # compares, no cumsum primitive, no MXU triangular matmul).
    cum = policy
    shift = 1
    while shift < A:
        cum = cum + jnp.concatenate(
            [jnp.zeros((shift, cum.shape[1]), f32), cum[:A - shift, :]], axis=0)
        shift *= 2
    count = jnp.sum((cum < u).astype(jnp.int32), axis=0, keepdims=True)
    # NOTE: if u exceeds the total policy mass (float-rounding corner; essentially never with
    # the exact divide) we clamp to A-1, whereas the NumPy reference would error/return 0.
    action_ref[...] = jnp.minimum(count, A - 1)

    # ---- compute_prediction_error ('torch' branch): rewards - v_values (broadcast) -------
    pe = rewards - v

    out_ref[0:A, :] = policy.astype(out_ref.dtype)
    out_ref[A:2 * A, :] = rewards.astype(out_ref.dtype)
    out_ref[2 * A:3 * A, :] = pe.astype(out_ref.dtype)


def actor_critic_forward(streams, scalars, *, temperature, feedback, valence_factor,
                         block_b=32768):
    """Fused ActorCritic forward hot path (get_reward + select_action + prediction error).

    Layout (lane-dense: trials on the 128-wide lane axis, tiny action axis on sublanes):
      streams : [3A, B] f32 -- rows [0:A)=w_values, [A:2A)=probabilities, [2A:3A)=rand_rew
      scalars : [2,  B] f32 -- row 0 = v_values, row 1 = u (per-trial uniform for sampling)

    B must be a multiple of 128 (allocate the RL trial buffers pre-padded upstream: no
    wrapper-side pad/slice copies).  Random/probability inputs are kept f32 on purpose: at A=4
    bf16 saves no HBM bytes (sublane padding) and would quantize the sampling distributions.

    Returns:
      stacked : [3A, B]       rows [0:A)=policy, [A:2A)=rewards, [2A:3A)=prediction_errors
      action  : [1,  B] int32 sampled action indices
    """
    threeA, B = streams.shape
    assert threeA % 3 == 0, "streams must stack w_values / probabilities / rand_rew along rows"
    A = threeA // 3
    assert scalars.shape == (2, B)
    assert B >= 128 and B % 128 == 0, (
        "B must be a multiple of 128; pre-pad the trial buffers upstream")

    # --- batch tiling: biggest lane tile that divides B (single block when B is small) ----
    max_tb = min(int(block_b), B)
    tb = 128
    for cand in range(max_tb // 128, 0, -1):
        t = cand * 128
        if B % t == 0:
            tb = t
            break
    num_blocks = B // tb
    # v7x megacore: when tiling is unavoidable, prefer an even block count so both
    # TensorCores get equal work (no-op on single-TC v5e/v6e).
    if num_blocks > 1 and num_blocks % 2 == 1:
        for cand in range(tb // 256, 0, -1):
            t = cand * 128
            if B % t == 0 and (B // t) % 2 == 0:
                tb, num_blocks = t, B // t
                break

    # Runtime hyperparameters live in SMEM (changing them does not retrigger a recompile).
    params = jnp.asarray(
        [1.0 / float(temperature), float(feedback), float(valence_factor)], jnp.float32)

    out_shape = (
        jax.ShapeDtypeStruct((3 * A, B), streams.dtype),   # policy / rewards / prediction errs
        jax.ShapeDtypeStruct((1, B), jnp.int32),           # sampled action index
    )

    # Deepen input buffering only when many blocks are in flight (per-block compute is far
    # shorter than the latency of the tiny DMAs).
    in_pipe = dict(pipeline_mode=pl.Buffered(3)) if num_blocks > 2 else {}
    stream_spec = pl.BlockSpec((3 * A, tb), lambda i: (0, i), **in_pipe)
    scalar_spec = pl.BlockSpec((2, tb), lambda i: (0, i), **in_pipe)
    out_spec = pl.BlockSpec((3 * A, tb), lambda i: (0, i))
    act_spec = pl.BlockSpec((1, tb), lambda i: (0, i))

    stacked, action = pl.pallas_call(
        _actor_critic_kernel,
        out_shape=out_shape,
        grid=(num_blocks,),
        in_specs=[pl.BlockSpec(memory_space=pltpu.MemorySpace.SMEM),   # hyperparameters
                  stream_spec, scalar_spec],
        out_specs=(out_spec, act_spec),
        compiler_params=pltpu.CompilerParams(
            dimension_semantics=("parallel",)),   # batch blocks shard across TCs (v7x megacore)
    )(params, streams, scalars)
    return stacked, action


if __name__ == "__main__":
    key = jax.random.PRNGKey(0)
    A, B = 4, 1024                 # 4 actions/stimuli, 1024 trials (lane-aligned -> no padding)
    temperature, feedback, valence_factor = 0.5, 1.0, 1.0
    k1, k2, k3, k4, k5 = jax.random.split(key, 5)

    w_values      = jax.random.normal(k1, (A, B), jnp.float32)        # actor weights
    probabilities = jax.random.uniform(k2, (A, B), jnp.float32)       # reward probabilities
    rand_rew      = jax.random.uniform(k3, (A, B), jnp.float32)       # rnd.random() per reward
    v_values      = 0.1 * jax.random.normal(k4, (1, B), jnp.float32)  # critic values (per trial)
    u             = jax.random.uniform(k5, (1, B), jnp.float32)       # rnd.random() per draw

    # In a real RL loop the trial buffers live in this stacked layout up front; these
    # concatenates are one-time demo setup, not part of the kernel hot path.
    streams = jnp.concatenate([w_values, probabilities, rand_rew], axis=0)   # [3A, B]
    scalars = jnp.concatenate([v_values, u], axis=0)                         # [2,  B]

    stacked, action = actor_critic_forward(
        streams, scalars,
        temperature=temperature, feedback=feedback, valence_factor=valence_factor)
    jax.block_until_ready((stacked, action))

    policy  = stacked[0:A]
    rewards = stacked[A:2 * A]
    pe      = stacked[2 * A:3 * A]
    act     = action[0]

    # ---- lightweight pure-JAX reference check -------------------------------------------
    ref_policy  = jax.nn.softmax(w_values / temperature, axis=0)
    ref_rewards = (rand_rew < probabilities).astype(jnp.float32) * feedback
    ref_pe      = ref_rewards - v_values
    ref_action  = jnp.argmax(jnp.cumsum(ref_policy, axis=0) >= u, axis=0)

    assert float(jnp.max(jnp.abs(policy - ref_policy))) < 1e-5
    assert float(jnp.max(jnp.abs(rewards - ref_rewards))) < 1e-6
    assert float(jnp.max(jnp.abs(pe - ref_pe))) < 1e-5
    assert int(jnp.min(act)) >= 0 and int(jnp.max(act)) <= A - 1
    # exact divide -> only float-rounding ties at cumsum == u can differ (essentially never)
    assert float(jnp.mean((act == ref_action).astype(jnp.float32))) > 0.995

    print("KERNEL_OK")
</pallas_src>

<mosaic_0001>
module attributes {stable_mosaic.version = 11 : i64} {
  func.func @_actor_critic_kernel(%arg0: i32, %arg1: memref<3xf32, #tpu.memory_space<smem>>, %arg2: memref<12x1024xf32, #tpu.memory_space<vmem>>, %arg3: memref<2x1024xf32, #tpu.memory_space<vmem>>, %arg4: memref<12x1024xf32, #tpu.memory_space<vmem>>, %arg5: memref<1x1024xi32, #tpu.memory_space<vmem>>) attributes {dimension_semantics = [#tpu.dimension_semantics<parallel>], iteration_bounds = array<i64: 1>, scalar_prefetch = 0 : i64, scratch_operands = 0 : i64, tpu.core_type = #tpu.core_type<tc>, window_params = [{transform_indices = @transform_0, window_bounds = array<i64: 3>}, {transform_indices = @transform_1, window_bounds = array<i64: 12, 1024>}, {transform_indices = @transform_2, window_bounds = array<i64: 2, 1024>}, {transform_indices = @transform_3, window_bounds = array<i64: 12, 1024>}, {transform_indices = @transform_4, window_bounds = array<i64: 1, 1024>}]} {
    %c0 = arith.constant 0 : index
    %0 = memref.load %arg1[%c0] : memref<3xf32, #tpu.memory_space<smem>>
    %c1 = arith.constant 1 : index
    %1 = memref.load %arg1[%c1] : memref<3xf32, #tpu.memory_space<smem>>
    %c0_0 = arith.constant 0 : index
    %c0_1 = arith.constant 0 : index
    %2 = vector.load %arg2[%c0_0, %c0_1] : memref<12x1024xf32, #tpu.memory_space<vmem>>, vector<12x1024xf32>
    %3 = vector.extract_strided_slice %2 {offsets = [0, 0], sizes = [4, 1024], strides = [1, 1]} : vector<12x1024xf32> to vector<4x1024xf32>
    %4 = vector.extract_strided_slice %2 {offsets = [4, 0], sizes = [4, 1024], strides = [1, 1]} : vector<12x1024xf32> to vector<4x1024xf32>
    %5 = vector.extract_strided_slice %2 {offsets = [8, 0], sizes = [4, 1024], strides = [1, 1]} : vector<12x1024xf32> to vector<4x1024xf32>
    %c0_2 = arith.constant 0 : index
    %c0_3 = arith.constant 0 : index
    %6 = vector.load %arg3[%c0_2, %c0_3] : memref<2x1024xf32, #tpu.memory_space<vmem>>, vector<2x1024xf32>
    %7 = vector.extract_strided_slice %6 {offsets = [0, 0], sizes = [1, 1024], strides = [1, 1]} : vector<2x1024xf32> to vector<1x1024xf32>
    %8 = vector.extract_strided_slice %6 {offsets = [1, 0], sizes = [1, 1024], strides = [1, 1]} : vector<2x1024xf32> to vector<1x1024xf32>
    %9 = arith.cmpf olt, %5, %4 : vector<4x1024xf32>
    %10 = arith.extui %9 : vector<4x1024xi1> to vector<4x1024xi32>
    %11 = arith.sitofp %10 : vector<4x1024xi32> to vector<4x1024xf32>
    %12 = vector.broadcast %1 : f32 to vector<4x1024xf32>
    %13 = arith.mulf %11, %12 : vector<4x1024xf32>
    %14 = vector.broadcast %0 : f32 to vector<4x1024xf32>
    %15 = arith.mulf %3, %14 : vector<4x1024xf32>
    %cst = arith.constant dense<0xFF800000> : vector<1024xf32>
    %16 = vector.multi_reduction <maximumf>, %15, %cst [0] : vector<4x1024xf32> to vector<1024xf32>
    %17 = vector.shape_cast %16 : vector<1024xf32> to vector<1x1024xf32>
    %18 = vector.broadcast %17 : vector<1x1024xf32> to vector<4x1024xf32>
    %19 = arith.subf %15, %18 : vector<4x1024xf32>
    %20 = math.exp %19 : vector<4x1024xf32>
    %cst_4 = arith.constant dense<0.000000e+00> : vector<1024xf32>
    %21 = vector.multi_reduction <add>, %20, %cst_4 [0] : vector<4x1024xf32> to vector<1024xf32>
    %22 = vector.shape_cast %21 : vector<1024xf32> to vector<1x1024xf32>
    %23 = vector.broadcast %22 : vector<1x1024xf32> to vector<4x1024xf32>
    %24 = arith.divf %20, %23 : vector<4x1024xf32>
    %cst_5 = arith.constant 0.000000e+00 : f32
    %25 = vector.broadcast %cst_5 : f32 to vector<1x1024xf32>
    %26 = vector.extract_strided_slice %24 {offsets = [0, 0], sizes = [3, 1024], strides = [1, 1]} : vector<4x1024xf32> to vector<3x1024xf32>
    %27 = tpu.concatenate %25, %26 in 0 : vector<1x1024xf32>, vector<3x1024xf32> -> vector<4x1024xf32>
    %28 = arith.addf %24, %27 : vector<4x1024xf32>
    %cst_6 = arith.constant 0.000000e+00 : f32
    %29 = vector.broadcast %cst_6 : f32 to vector<2x1024xf32>
    %30 = vector.extract_strided_slice %28 {offsets = [0, 0], sizes = [2, 1024], strides = [1, 1]} : vector<4x1024xf32> to vector<2x1024xf32>
    %31 = tpu.concatenate %29, %30 in 0 : vector<2x1024xf32>, vector<2x1024xf32> -> vector<4x1024xf32>
    %32 = arith.addf %28, %31 : vector<4x1024xf32>
    %33 = vector.broadcast %8 : vector<1x1024xf32> to vector<4x1024xf32>
    %34 = arith.cmpf olt, %32, %33 : vector<4x1024xf32>
    %35 = arith.extui %34 : vector<4x1024xi1> to vector<4x1024xi32>
    %cst_7 = arith.constant dense<0> : vector<1024xi32>
    %36 = vector.multi_reduction <add>, %35, %cst_7 [0] : vector<4x1024xi32> to vector<1024xi32>
    %37 = vector.shape_cast %36 : vector<1024xi32> to vector<1x1024xi32>
    %c3_i32 = arith.constant 3 : i32
    %38 = vector.broadcast %c3_i32 : i32 to vector<1x1024xi32>
    %39 = arith.minsi %37, %38 : vector<1x1024xi32>
    %c0_8 = arith.constant 0 : index
    %c0_9 = arith.constant 0 : index
    %40 = vector.load %arg5[%c0_8, %c0_9] : memref<1x1024xi32, #tpu.memory_space<vmem>>, vector<1x1024xi32>
    tpu.vector_store %arg5[%c0_8, %c0_9], %39 {strides = array<i32>} : memref<1x1024xi32, #tpu.memory_space<vmem>>, vector<1x1024xi32>,
    %41 = vector.broadcast %7 : vector<1x1024xf32> to vector<4x1024xf32>
    %42 = arith.subf %13, %41 : vector<4x1024xf32>
    %c0_10 = arith.constant 0 : index
    %c0_11 = arith.constant 0 : index
    %43 = vector.load %arg4[%c0_10, %c0_11] : memref<12x1024xf32, #tpu.memory_space<vmem>>, vector<4x1024xf32>
    tpu.vector_store %arg4[%c0_10, %c0_11], %24 {strides = array<i32>} : memref<12x1024xf32, #tpu.memory_space<vmem>>, vector<4x1024xf32>,
    %c4 = arith.constant 4 : index
    %c0_12 = arith.constant 0 : index
    %44 = vector.load %arg4[%c4, %c0_12] : memref<12x1024xf32, #tpu.memory_space<vmem>>, vector<4x1024xf32>
    tpu.vector_store %arg4[%c4, %c0_12], %13 {strides = array<i32>} : memref<12x1024xf32, #tpu.memory_space<vmem>>, vector<4x1024xf32>,
    %c8 = arith.constant 8 : index
    %c0_13 = arith.constant 0 : index
    %45 = vector.load %arg4[%c8, %c0_13] : memref<12x1024xf32, #tpu.memory_space<vmem>>, vector<4x1024xf32>
    tpu.vector_store %arg4[%c8, %c0_13], %42 {strides = array<i32>} : memref<12x1024xf32, #tpu.memory_space<vmem>>, vector<4x1024xf32>,
    return
  }
  func.func @transform_0(%arg0: i32) -> i32 {
    %c0_i32 = arith.constant 0 : i32
    %c0_i32_0 = arith.constant 0 : i32
    return %c0_i32 : i32
  }
  func.func @transform_1(%arg0: i32) -> (i32, i32) {
    %c0_i32 = arith.constant 0 : i32
    %c0_i32_0 = arith.constant 0 : i32
    return %c0_i32, %arg0 : i32, i32
  }
  func.func @transform_2(%arg0: i32) -> (i32, i32) {
    %c0_i32 = arith.constant 0 : i32
    %c0_i32_0 = arith.constant 0 : i32
    return %c0_i32, %arg0 : i32, i32
  }
  func.func @transform_3(%arg0: i32) -> (i32, i32) {
    %c0_i32 = arith.constant 0 : i32
    %c0_i32_0 = arith.constant 0 : i32
    return %c0_i32, %arg0 : i32, i32
  }
  func.func @transform_4(%arg0: i32) -> (i32, i32) {
    %c0_i32 = arith.constant 0 : i32
    %c0_i32_0 = arith.constant 0 : i32
    return %c0_i32, %arg0 : i32, i32
  }
}

</mosaic_0001>

<llo_original>
// kernel: tpu_custom_call.1
$region0: #{tpu_custom_call.1}
  #allocation0 [shape = 'u32[]', space=smem, size = 0x4, offset = 0x4, fixed_abs, tag = 'smem constant byte address 0x4 - core index']
  #allocation1 [shape = 'u32[144,128]{1,0:T(1,128)}', space=vmem, size = 0x12000, scoped, tag = 'internal scratch']
  %s0 = inlined_call_operand.hbm [shape: f32[3], index: 0, kind: input, shape index: {}]
  %s1 = inlined_call_operand.hbm [shape: f32[12,1024], index: 1, kind: input, shape index: {}]
  %s2 = inlined_call_operand.hbm [shape: f32[2,1024], index: 2, kind: input, shape index: {}]
  %s3 = inlined_call_operand.hbm [shape: f32[12,1024], index: 3, kind: output, shape index: {0}]
  %s4 = inlined_call_operand.hbm [shape: s32[1,1024], index: 4, kind: output, shape index: {1}]
  %5 = xla_tuple %s3, %s4
  %s6 = sld [smem:[#allocation0]]
  $region42: #{tpu_custom_call.1} parent=0
    _
  %s8 = ssub.s32 1, %s6
  %s9 = scalar_select 0, %s8, %s6
  $region1: #{tpu_custom_call.1} parent=0
    #allocation2 [shape = 'u8[512]{0}', space=smem, size = 0x200, scoped, tag = 'input window, operand 0, single buffered']
    #allocation3 [shape = 's32[1]{0}', space=sflag, size = 0x4, scoped, tag = 'scoped memory for tpu_custom_call.1']
    #allocation4 [shape = 's32[1]{0}', space=sflag, size = 0x4, scoped, tag = 'scoped memory for tpu_custom_call.1']
    #allocation5 [shape = 's32[1]{0}', space=sflag, size = 0x4, scoped, tag = 'scoped memory for tpu_custom_call.1']
    #allocation6 [shape = 'u8[65536]{0}', space=vmem, size = 0x10000, scoped, tag = 'input window, operand 1, single buffered']
    #allocation7 [shape = 'u8[8192]{0}', space=vmem, size = 0x2000, scoped, tag = 'input window, operand 2, single buffered']
    #allocation8 [shape = 's32[1]{0}', space=sflag, size = 0x4, scoped, tag = 'scoped memory for tpu_custom_call.1']
    #allocation9 [shape = 'u8[65536]{0}', space=vmem, size = 0x10000, scoped, tag = 'output window, operand 0, single buffered']
    #allocation10 [shape = 'u8[4096]{0}', space=vmem, size = 0x1000, scoped, tag = 'output window, operand 1, single buffered']
    #allocation11 [shape = 's32[1]{0}', space=sflag, size = 0x4, scoped, tag = 'scoped memory for tpu_custom_call.1']
    %10 = vsyncpa [#allocation5], 0
    %11 = vsyncpa [#allocation3], 0
    %12 = vsyncpa [#allocation8], 0
    %13 = vsyncpa [#allocation4], 0
    %14 = vsyncpa [#allocation11], 0
    // Predicated region
    $region2: #{tpu_custom_call.1} parent=1 // pred_check
      _
    $region3: #{tpu_custom_call.1} parent=1 // pred_check_branch
      %16 = sbr.rel (0) target = $region5
    $region4: #{tpu_custom_call.1} parent=1 // pred_region
      %s18 = ssub.s32 16, 16
      %19 = vsyncadd [#allocation5], %s18
      %22 = dma.hbm_to_smem %s0, 16, [#allocation2], [#allocation5]
    $region5: #{tpu_custom_call.1} parent=1 // pred_fallthru
      _
    // Predicated region
    $region6: #{tpu_custom_call.1} parent=1 // pred_check
      _
    $region7: #{tpu_custom_call.1} parent=1 // pred_check_branch
      %24 = sbr.rel (0) target = $region9
    $region8: #{tpu_custom_call.1} parent=1 // pred_region
      %s26 = ssub.s32 2048, 2048
      %27 = vsyncadd [#allocation3], %s26
      %s28 = sshll.u32 [#allocation6], 4
      %s29 = int_to_ptr.vmem [resolvable:$true] %s28
      %34 = dma.hbm_to_vmem [thread:$0]  %s1, 2048, %s29, [#allocation3], 1024, 1024, 64
    $region9: #{tpu_custom_call.1} parent=1 // pred_fallthru
      _
    // Predicated region
    $region10: #{tpu_custom_call.1} parent=1 // pred_check
      _
    $region11: #{tpu_custom_call.1} parent=1 // pred_check_branch
      %36 = sbr.rel (0) target = $region13
    $region12: #{tpu_custom_call.1} parent=1 // pred_region
      %s38 = ssub.s32 256, 256
      %39 = vsyncadd [#allocation8], %s38
      %s41 = sshll.u32 [#allocation7], 4
      %s42 = int_to_ptr.vmem [resolvable:$true] %s41
      %44 = dma.hbm_to_vmem [thread:$0]  %s2, 256, %s42, [#allocation8]
    $region13: #{tpu_custom_call.1} parent=1 // pred_fallthru
      _
    // Predicated region
    $region14: #{tpu_custom_call.1} parent=1 // pred_check
      _
    $region15: #{tpu_custom_call.1} parent=1 // pred_check_branch
      %46 = sbr.rel (0) target = $region17
    $region16: #{tpu_custom_call.1} parent=1 // pred_region
      %47 = dma.done [#allocation5], 16
    $region17: #{tpu_custom_call.1} parent=1 // pred_fallthru
      _
    // Predicated region
    $region18: #{tpu_custom_call.1} parent=1 // pred_check
      _
    $region19: #{tpu_custom_call.1} parent=1 // pred_check_branch
      %49 = sbr.rel (0) target = $region21
    $region20: #{tpu_custom_call.1} parent=1 // pred_region
      %50 = dma.done [#allocation3], 2048
    $region21: #{tpu_custom_call.1} parent=1 // pred_fallthru
      _
    // Predicated region
    $region22: #{tpu_custom_call.1} parent=1 // pred_check
      _
    $region23: #{tpu_custom_call.1} parent=1 // pred_check_branch
      %52 = sbr.rel (0) target = $region25
    $region24: #{tpu_custom_call.1} parent=1 // pred_region
      %53 = dma.done [#allocation8], 256
    $region25: #{tpu_custom_call.1} parent=1 // pred_fallthru
      _
    %54 = sfence
    %s55 = sld [smem:[#allocation2]]
    %s56 = sld [smem:[#allocation2 + $0x1]]
    %v57 = vld [vmem:[#allocation6] sm:$0xff]
    %v58 = vld [vmem:[#allocation6 + $0x8] sm:$0xff]
    %v59 = vld [vmem:[#allocation6 + $0x10] sm:$0xff]
    %v60 = vld [vmem:[#allocation6 + $0x18] sm:$0xff]
    %v61 = vld [vmem:[#allocation6 + $0x20] sm:$0xff]
    %v62 = vld [vmem:[#allocation6 + $0x28] sm:$0xff]
    %v63 = vld [vmem:[#allocation6 + $0x30] sm:$0xff]
    %v64 = vld [vmem:[#allocation6 + $0x38] sm:$0xff]
    %v65 = vld [vmem:[#allocation6 + $0x40] sm:$0xf]
    %v66 = vld [vmem:[#allocation6 + $0x48] sm:$0xf]
    %v67 = vld [vmem:[#allocation6 + $0x50] sm:$0xf]
    %v68 = vld [vmem:[#allocation6 + $0x58] sm:$0xf]
    %v69 = vld [vmem:[#allocation6 + $0x60] sm:$0xf]
    %v70 = vld [vmem:[#allocation6 + $0x68] sm:$0xf]
    %v71 = vld [vmem:[#allocation6 + $0x70] sm:$0xf]
    %v72 = vld [vmem:[#allocation6 + $0x78] sm:$0xf]
    %v73 = vld [vmem:[#allocation7] sm:$0xff]
    %v74 = vld [vmem:[#allocation7 + $0x8] sm:$0xff]
    %v83 = vrot.slane %v57, 4
    %v84 = vrot.slane %v58, 4
    %v85 = vrot.slane %v59, 4
    %v86 = vrot.slane %v60, 4
    %v87 = vrot.slane %v61, 4
    %v88 = vrot.slane %v62, 4
    %v89 = vrot.slane %v63, 4
    %v90 = vrot.slane %v64, 4
    %vm99 = vcmp.lt.f32.partialorder %v65, %v83
    %vm100 = vcmp.lt.f32.partialorder %v66, %v84
    %vm101 = vcmp.lt.f32.partialorder %v67, %v85
    %vm102 = vcmp.lt.f32.partialorder %v68, %v86
    %vm103 = vcmp.lt.f32.partialorder %v69, %v87
    %vm104 = vcmp.lt.f32.partialorder %v70, %v88
    %vm105 = vcmp.lt.f32.partialorder %v71, %v89
    %vm106 = vcmp.lt.f32.partialorder %v72, %v90
    %v107 = vsel %vm99, 1, 0
    %v108 = vsel %vm100, 1, 0
    %v109 = vsel %vm101, 1, 0
    %v110 = vsel %vm102, 1, 0
    %v111 = vsel %vm103, 1, 0
    %v112 = vsel %vm104, 1, 0
    %v113 = vsel %vm105, 1, 0
    %v114 = vsel %vm106, 1, 0
    %v115 = vcvt.s32.f32 %v107
    %v116 = vcvt.s32.f32 %v108
    %v117 = vcvt.s32.f32 %v109
    %v118 = vcvt.s32.f32 %v110
    %v119 = vcvt.s32.f32 %v111
    %v120 = vcvt.s32.f32 %v112
    %v121 = vcvt.s32.f32 %v113
    %v122 = vcvt.s32.f32 %v114
    %v123 = vstv %s56
    %v124 = vmul.f32 %v115, %v123
    %v125 = vmul.f32 %v116, %v123
    %v126 = vmul.f32 %v117, %v123
    %v127 = vmul.f32 %v118, %v123
    %v128 = vmul.f32 %v119, %v123
    %v129 = vmul.f32 %v120, %v123
    %v130 = vmul.f32 %v121, %v123
    %v131 = vmul.f32 %v122, %v123
    %v132 = vstv %s55
    %v133 = vmul.f32 %v57, %v132
    %v134 = vmul.f32 %v58, %v132
    %v135 = vmul.f32 %v59, %v132
    %v136 = vmul.f32 %v60, %v132
    %v137 = vmul.f32 %v61, %v132
    %v138 = vmul.f32 %v62, %v132
    %v139 = vmul.f32 %v63, %v132
    %v140 = vmul.f32 %v64, %v132
    %vm141 = vcmask 1043456
    %v142 = vsel %vm141, %v133, -inf
    %v143 = vrot.slane %v142, 4
    %v144 = vmax.f32 %v142, %v143
    %v145 = vrot.slane %v144, 2
    %v146 = vmax.f32 %v144, %v145
    %v147 = vrot.slane %v146, 1
    %v148 = vmax.f32 %v146, %v147
    %v149 = vsel %vm141, %v134, -inf
    %v150 = vrot.slane %v149, 4
    %v151 = vmax.f32 %v149, %v150
    %v152 = vrot.slane %v151, 2
    %v153 = vmax.f32 %v151, %v152
    %v154 = vrot.slane %v153, 1
    %v155 = vmax.f32 %v153, %v154
    %v156 = vsel %vm141, %v135, -inf
    %v157 = vrot.slane %v156, 4
    %v158 = vmax.f32 %v156, %v157
    %v159 = vrot.slane %v158, 2
    %v160 = vmax.f32 %v158, %v159
    %v161 = vrot.slane %v160, 1
    %v162 = vmax.f32 %v160, %v161
    %v163 = vsel %vm141, %v136, -inf
    %v164 = vrot.slane %v163, 4
    %v165 = vmax.f32 %v163, %v164
    %v166 = vrot.slane %v165, 2
    %v167 = vmax.f32 %v165, %v166
    %v168 = vrot.slane %v167, 1
    %v169 = vmax.f32 %v167, %v168
    %v170 = vsel %vm141, %v137, -inf
    %v171 = vrot.slane %v170, 4
    %v172 = vmax.f32 %v170, %v171
    %v173 = vrot.slane %v172, 2
    %v174 = vmax.f32 %v172, %v173
    %v175 = vrot.slane %v174, 1
    %v176 = vmax.f32 %v174, %v175
    %v177 = vsel %vm141, %v138, -inf
    %v178 = vrot.slane %v177, 4
    %v179 = vmax.f32 %v177, %v178
    %v180 = vrot.slane %v179, 2
    %v181 = vmax.f32 %v179, %v180
    %v182 = vrot.slane %v181, 1
    %v183 = vmax.f32 %v181, %v182
    %v184 = vsel %vm141, %v139, -inf
    %v185 = vrot.slane %v184, 4
    %v186 = vmax.f32 %v184, %v185
    %v187 = vrot.slane %v186, 2
    %v188 = vmax.f32 %v186, %v187
    %v189 = vrot.slane %v188, 1
    %v190 = vmax.f32 %v188, %v189
    %v191 = vsel %vm141, %v140, -inf
    %v192 = vrot.slane %v191, 4
    %v193 = vmax.f32 %v191, %v192
    %v194 = vrot.slane %v193, 2
    %v195 = vmax.f32 %v193, %v194
    %v196 = vrot.slane %v195, 1
    %v197 = vmax.f32 %v195, %v196
    %v198 = vsub.f32 %v133, %v148
    %v199 = vsub.f32 %v134, %v155
    %v200 = vsub.f32 %v135, %v162
    %v201 = vsub.f32 %v136, %v169
    %v202 = vsub.f32 %v137, %v176
    %v203 = vsub.f32 %v138, %v183
    %v204 = vsub.f32 %v139, %v190
    %v205 = vsub.f32 %v140, %v197
    %v206 = vmul.f32 %v198, 1.442695
    %v207 = vpow.pop %v206
    %v208 = vmul.f32 %v199, 1.442695
    %v209 = vpow.pop %v208
    %v210 = vmul.f32 %v200, 1.442695
    %v211 = vpow.pop %v210
    %v212 = vmul.f32 %v201, 1.442695
    %v213 = vpow.pop %v212
    %v214 = vmul.f32 %v202, 1.442695
    %v215 = vpow.pop %v214
    %v216 = vmul.f32 %v203, 1.442695
    %v217 = vpow.pop %v216
    %v218 = vmul.f32 %v204, 1.442695
    %v219 = vpow.pop %v218
    %v220 = vmul.f32 %v205, 1.442695
    %v221 = vpow.pop %v220
    %v222 = vsel %vm141, %v207, 0.0
    %v223 = vrot.slane %v222, 4
    %v224 = vadd.f32 %v222, %v223
    %v225 = vrot.slane %v224, 2
    %v226 = vadd.f32 %v224, %v225
    %v227 = vrot.slane %v226, 1
    %v228 = vadd.f32 %v226, %v227
    %v229 = vsel %vm141, %v209, 0.0
    %v230 = vrot.slane %v229, 4
    %v231 = vadd.f32 %v229, %v230
    %v232 = vrot.slane %v231, 2
    %v233 = vadd.f32 %v231, %v232
    %v234 = vrot.slane %v233, 1
    %v235 = vadd.f32 %v233, %v234
    %v236 = vsel %vm141, %v211, 0.0
    %v237 = vrot.slane %v236, 4
    %v238 = vadd.f32 %v236, %v237
    %v239 = vrot.slane %v238, 2
    %v240 = vadd.f32 %v238, %v239
    %v241 = vrot.slane %v240, 1
    %v242 = vadd.f32 %v240, %v241
    %v243 = vsel %vm141, %v213, 0.0
    %v244 = vrot.slane %v243, 4
    %v245 = vadd.f32 %v243, %v244
    %v246 = vrot.slane %v245, 2
    %v247 = vadd.f32 %v245, %v246
    %v248 = vrot.slane %v247, 1
    %v249 = vadd.f32 %v247, %v248
    %v250 = vsel %vm141, %v215, 0.0
    %v251 = vrot.slane %v250, 4
    %v252 = vadd.f32 %v250, %v251
    %v253 = vrot.slane %v252, 2
    %v254 = vadd.f32 %v252, %v253
    %v255 = vrot.slane %v254, 1
    %v256 = vadd.f32 %v254, %v255
    %v257 = vsel %vm141, %v217, 0.0
    %v258 = vrot.slane %v257, 4
    %v259 = vadd.f32 %v257, %v258
    %v260 = vrot.slane %v259, 2
    %v261 = vadd.f32 %v259, %v260
    %v262 = vrot.slane %v261, 1
    %v263 = vadd.f32 %v261, %v262
    %v264 = vsel %vm141, %v219, 0.0
    %v265 = vrot.slane %v264, 4
    %v266 = vadd.f32 %v264, %v265
    %v267 = vrot.slane %v266, 2
    %v268 = vadd.f32 %v266, %v267
    %v269 = vrot.slane %v268, 1
    %v270 = vadd.f32 %v268, %v269
    %v271 = vsel %vm141, %v221, 0.0
    %v272 = vrot.slane %v271, 4
    %v273 = vadd.f32 %v271, %v272
    %v274 = vrot.slane %v273, 2
    %v275 = vadd.f32 %v273, %v274
    %v276 = vrot.slane %v275, 1
    %v277 = vadd.f32 %v275, %v276
    %v278 = vrcp.pop %v228
    %v279 = vmul.f32 %v207, %v278
    %v280 = vrcp.pop %v235
    %v281 = vmul.f32 %v209, %v280
    %v282 = vrcp.pop %v242
    %v283 = vmul.f32 %v211, %v282
    %v284 = vrcp.pop %v249
    %v285 = vmul.f32 %v213, %v284
    %v286 = vrcp.pop %v256
    %v287 = vmul.f32 %v215, %v286
    %v288 = vrcp.pop %v263
    %v289 = vmul.f32 %v217, %v288
    %v290 = vrcp.pop %v270
    %v291 = vmul.f32 %v219, %v290
    %v292 = vrcp.pop %v277
    %v293 = vmul.f32 %v221, %v292
    %v302 = vrot.slane %v279, 7
    %v303 = vrot.slane %v281, 7
    %v304 = vrot.slane %v283, 7
    %v305 = vrot.slane %v285, 7
    %v306 = vrot.slane %v287, 7
    %v307 = vrot.slane %v289, 7
    %v308 = vrot.slane %v291, 7
    %v309 = vrot.slane %v293, 7
    %vm318 = vcmask 1040384
    %v319 = vsel %vm318, 0.0, %v302
    %v320 = vsel %vm318, 0.0, %v303
    %v321 = vsel %vm318, 0.0, %v304
    %v322 = vsel %vm318, 0.0, %v305
    %v323 = vsel %vm318, 0.0, %v306
    %v324 = vsel %vm318, 0.0, %v307
    %v325 = vsel %vm318, 0.0, %v308
    %v326 = vsel %vm318, 0.0, %v309
    %v327 = vadd.f32 %v279, %v319
    %v328 = vadd.f32 %v281, %v320
    %v329 = vadd.f32 %v283, %v321
    %v330 = vadd.f32 %v285, %v322
    %v331 = vadd.f32 %v287, %v323
    %v332 = vadd.f32 %v289, %v324
    %v333 = vadd.f32 %v291, %v325
    %v334 = vadd.f32 %v293, %v326
    %v343 = vrot.slane %v327, 6
    %v344 = vrot.slane %v328, 6
    %v345 = vrot.slane %v329, 6
    %v346 = vrot.slane %v330, 6
    %v347 = vrot.slane %v331, 6
    %v348 = vrot.slane %v332, 6
    %v349 = vrot.slane %v333, 6
    %v350 = vrot.slane %v334, 6
    %vm359 = vcmask 1041408
    %v360 = vsel %vm359, 0.0, %v343
    %v361 = vsel %vm359, 0.0, %v344
    %v362 = vsel %vm359, 0.0, %v345
    %v363 = vsel %vm359, 0.0, %v346
    %v364 = vsel %vm359, 0.0, %v347
    %v365 = vsel %vm359, 0.0, %v348
    %v366 = vsel %vm359, 0.0, %v349
    %v367 = vsel %vm359, 0.0, %v350
    %v368 = vadd.f32 %v327, %v360
    %v369 = vadd.f32 %v328, %v361
    %v370 = vadd.f32 %v329, %v362
    %v371 = vadd.f32 %v330, %v363
    %v372 = vadd.f32 %v331, %v364
    %v373 = vadd.f32 %v332, %v365
    %v374 = vadd.f32 %v333, %v366
    %v375 = vadd.f32 %v334, %v367
    %v378 = vlaneseq
    %v379 = vshrl.u32 %v378, 7
    %v380 = vsub.s32 1, %v379
    %v381 = vrot.slane %v73, %v380
    %v382 = vlaneseq
    %v383 = vshrl.u32 %v382, 7
    %v384 = vsub.s32 3, %v383
    %v385 = vrot.slane %v73, %v384
    %v386 = vlaneseq
    %v387 = vshrl.u32 %v386, 7
    %v388 = vsub.s32 5, %v387
    %v389 = vrot.slane %v73, %v388
    %v390 = vlaneseq
    %v391 = vshrl.u32 %v390, 7
    %v392 = vsub.s32 7, %v391
    %v393 = vrot.slane %v73, %v392
    %v394 = vlaneseq
    %v395 = vshrl.u32 %v394, 7
    %v396 = vsub.s32 1, %v395
    %v397 = vrot.slane %v74, %v396
    %v398 = vlaneseq
    %v399 = vshrl.u32 %v398, 7
    %v400 = vsub.s32 3, %v399
    %v401 = vrot.slane %v74, %v400
    %v402 = vlaneseq
    %v403 = vshrl.u32 %v402, 7
    %v404 = vsub.s32 5, %v403
    %v405 = vrot.slane %v74, %v404
    %v406 = vlaneseq
    %v407 = vshrl.u32 %v406, 7
    %v408 = vsub.s32 7, %v407
    %v409 = vrot.slane %v74, %v408
    %v418 = vlaneseq
    %v419 = vshrl.u32 %v418, 7
    %v420 = vsub.s32 1, %v419
    %v421 = vrot.slane %v381, %v420
    %v422 = vlaneseq
    %v423 = vshrl.u32 %v422, 7
    %v424 = vsub.s32 1, %v423
    %v425 = vrot.slane %v385, %v424
    %v426 = vlaneseq
    %v427 = vshrl.u32 %v426, 7
    %v428 = vsub.s32 1, %v427
    %v429 = vrot.slane %v389, %v428
    %v430 = vlaneseq
    %v431 = vshrl.u32 %v430, 7
    %v432 = vsub.s32 1, %v431
    %v433 = vrot.slane %v393, %v432
    %v434 = vlaneseq
    %v435 = vshrl.u32 %v434, 7
    %v436 = vsub.s32 1, %v435
    %v437 = vrot.slane %v397, %v436
    %v438 = vlaneseq
    %v439 = vshrl.u32 %v438, 7
    %v440 = vsub.s32 1, %v439
    %v441 = vrot.slane %v401, %v440
    %v442 = vlaneseq
    %v443 = vshrl.u32 %v442, 7
    %v444 = vsub.s32 1, %v443
    %v445 = vrot.slane %v405, %v444
    %v446 = vlaneseq
    %v447 = vshrl.u32 %v446, 7
    %v448 = vsub.s32 1, %v447
    %v449 = vrot.slane %v409, %v448
    %vm450 = vcmp.lt.f32.partialorder %v368, %v421
    %vm451 = vcmp.lt.f32.partialorder %v369, %v425
    %vm452 = vcmp.lt.f32.partialorder %v370, %v429
    %vm453 = vcmp.lt.f32.partialorder %v371, %v433
    %vm454 = vcmp.lt.f32.partialorder %v372, %v437
    %vm455 = vcmp.lt.f32.partialorder %v373, %v441
    %vm456 = vcmp.lt.f32.partialorder %v374, %v445
    %vm457 = vcmp.lt.f32.partialorder %v375, %v449
    %v458 = vsel %vm450, 1, 0
    %v459 = vsel %vm451, 1, 0
    %v460 = vsel %vm452, 1, 0
    %v461 = vsel %vm453, 1, 0
    %v462 = vsel %vm454, 1, 0
    %v463 = vsel %vm455, 1, 0
    %v464 = vsel %vm456, 1, 0
    %v465 = vsel %vm457, 1, 0
    %v466 = vsel %vm141, %v458, 0
    %v467 = vrot.slane %v466, 4
    %v468 = vadd.s32 %v466, %v467
    %v469 = vrot.slane %v468, 2
    %v470 = vadd.s32 %v468, %v469
    %v471 = vrot.slane %v470, 1
    %v472 = vadd.s32 %v470, %v471
    %v473 = vsel %vm141, %v459, 0
    %v474 = vrot.slane %v473, 4
    %v475 = vadd.s32 %v473, %v474
    %v476 = vrot.slane %v475, 2
    %v477 = vadd.s32 %v475, %v476
    %v478 = vrot.slane %v477, 1
    %v479 = vadd.s32 %v477, %v478
    %v480 = vsel %vm141, %v460, 0
    %v481 = vrot.slane %v480, 4
    %v482 = vadd.s32 %v480, %v481
    %v483 = vrot.slane %v482, 2
    %v484 = vadd.s32 %v482, %v483
    %v485 = vrot.slane %v484, 1
    %v486 = vadd.s32 %v484, %v485
    %v487 = vsel %vm141, %v461, 0
    %v488 = vrot.slane %v487, 4
    %v489 = vadd.s32 %v487, %v488
    %v490 = vrot.slane %v489, 2
    %v491 = vadd.s32 %v489, %v490
    %v492 = vrot.slane %v491, 1
    %v493 = vadd.s32 %v491, %v492
    %v494 = vsel %vm141, %v462, 0
    %v495 = vrot.slane %v494, 4
    %v496 = vadd.s32 %v494, %v495
    %v497 = vrot.slane %v496, 2
    %v498 = vadd.s32 %v496, %v497
    %v499 = vrot.slane %v498, 1
    %v500 = vadd.s32 %v498, %v499
    %v501 = vsel %vm141, %v463, 0
    %v502 = vrot.slane %v501, 4
    %v503 = vadd.s32 %v501, %v502
    %v504 = vrot.slane %v503, 2
    %v505 = vadd.s32 %v503, %v504
    %v506 = vrot.slane %v505, 1
    %v507 = vadd.s32 %v505, %v506
    %v508 = vsel %vm141, %v464, 0
    %v509 = vrot.slane %v508, 4
    %v510 = vadd.s32 %v508, %v509
    %v511 = vrot.slane %v510, 2
    %v512 = vadd.s32 %v510, %v511
    %v513 = vrot.slane %v512, 1
    %v514 = vadd.s32 %v512, %v513
    %v515 = vsel %vm141, %v465, 0
    %v516 = vrot.slane %v515, 4
    %v517 = vadd.s32 %v515, %v516
    %v518 = vrot.slane %v517, 2
    %v519 = vadd.s32 %v517, %v518
    %v520 = vrot.slane %v519, 1
    %v521 = vadd.s32 %v519, %v520
    %vm522 = vcmp.lt.s32.totalorder %v472, 3
    %v523 = vsel %vm522, %v472, 3
    %vm524 = vcmp.lt.s32.totalorder %v479, 3
    %v525 = vsel %vm524, %v479, 3
    %vm526 = vcmp.lt.s32.totalorder %v486, 3
    %v527 = vsel %vm526, %v486, 3
    %vm528 = vcmp.lt.s32.totalorder %v493, 3
    %v529 = vsel %vm528, %v493, 3
    %vm530 = vcmp.lt.s32.totalorder %v500, 3
    %v531 = vsel %vm530, %v500, 3
    %vm532 = vcmp.lt.s32.totalorder %v507, 3
    %v533 = vsel %vm532, %v507, 3
    %vm534 = vcmp.lt.s32.totalorder %v514, 3
    %v535 = vsel %vm534, %v514, 3
    %vm536 = vcmp.lt.s32.totalorder %v521, 3
    %v537 = vsel %vm536, %v521, 3
    %v538 = vcombine.low %v523, %v525
    %v539 = vcombine.low %v527, %v529
    %v540 = vcombine.low %v531, %v533
    %v541 = vcombine.low %v535, %v537
    %v543 = vunpack.c.l.s4 1966171168
    %v544 = vunpack.c.0.s8 %v543
    %v545 = vlaneseq
    %v546 = vshrl.u32 %v545, 7
    %v547 = vsub.s32 %v544, %v546
    %v548 = vrot.slane %v538, %v547
    %v550 = vunpack.c.l.s4 1966171168
    %v551 = vunpack.c.0.s8 %v550
    %v552 = vlaneseq
    %v553 = vshrl.u32 %v552, 7
    %v554 = vsub.s32 %v551, %v553
    %v555 = vrot.slane %v539, %v554
    %v557 = vunpack.c.l.s4 1966171168
    %v558 = vunpack.c.0.s8 %v557
    %v559 = vlaneseq
    %v560 = vshrl.u32 %v559, 7
    %v561 = vsub.s32 %v558, %v560
    %v562 = vrot.slane %v540, %v561
    %v564 = vunpack.c.l.s4 1966171168
    %v565 = vunpack.c.0.s8 %v564
    %v566 = vlaneseq
    %v567 = vshrl.u32 %v566, 7
    %v568 = vsub.s32 %v565, %v567
    %v569 = vrot.slane %v541, %v568
    %v570 = vcombine.low %v548, %v555
    %v571 = vcombine.low %v562, %v569
    %v573 = vunpack.c.l.s4 1966171168
    %v574 = vunpack.c.0.s8 %v573
    %v575 = vlaneseq
    %v576 = vshrl.u32 %v575, 7
    %v577 = vsub.s32 %v574, %v576
    %v578 = vrot.slane %v570, %v577
    %v580 = vunpack.c.l.s4 1966171168
    %v581 = vunpack.c.0.s8 %v580
    %v582 = vlaneseq
    %v583 = vshrl.u32 %v582, 7
    %v584 = vsub.s32 %v581, %v583
    %v585 = vrot.slane %v571, %v584
    %v586 = vcombine.low %v578, %v585
    %587 = vst [vmem:[#allocation10] sm:$0xff] %v586
    %v588 = vlaneseq
    %v589 = vshrl.u32 %v588, 7
    %v590 = vsub.s32 0, %v589
    %v591 = vrot.slane %v73, %v590
    %v592 = vlaneseq
    %v593 = vshrl.u32 %v592, 7
    %v594 = vsub.s32 2, %v593
    %v595 = vrot.slane %v73, %v594
    %v596 = vlaneseq
    %v597 = vshrl.u32 %v596, 7
    %v598 = vsub.s32 4, %v597
    %v599 = vrot.slane %v73, %v598
    %v600 = vlaneseq
    %v601 = vshrl.u32 %v600, 7
    %v602 = vsub.s32 6, %v601
    %v603 = vrot.slane %v73, %v602
    %v604 = vlaneseq
    %v605 = vshrl.u32 %v604, 7
    %v606 = vsub.s32 0, %v605
    %v607 = vrot.slane %v74, %v606
    %v608 = vlaneseq
    %v609 = vshrl.u32 %v608, 7
    %v610 = vsub.s32 2, %v609
    %v611 = vrot.slane %v74, %v610
    %v612 = vlaneseq
    %v613 = vshrl.u32 %v612, 7
    %v614 = vsub.s32 4, %v613
    %v615 = vrot.slane %v74, %v614
    %v616 = vlaneseq
    %v617 = vshrl.u32 %v616, 7
    %v618 = vsub.s32 6, %v617
    %v619 = vrot.slane %v74, %v618
    %v628 = vlaneseq
    %v629 = vshrl.u32 %v628, 7
    %v630 = vsub.s32 0, %v629
    %v631 = vrot.slane %v591, %v630
    %v632 = vlaneseq
    %v633 = vshrl.u32 %v632, 7
    %v634 = vsub.s32 0, %v633
    %v635 = vrot.slane %v595, %v634
    %v636 = vlaneseq
    %v637 = vshrl.u32 %v636, 7
    %v638 = vsub.s32 0, %v637
    %v639 = vrot.slane %v599, %v638
    %v640 = vlaneseq
    %v641 = vshrl.u32 %v640, 7
    %v642 = vsub.s32 0, %v641
    %v643 = vrot.slane %v603, %v642
    %v644 = vlaneseq
    %v645 = vshrl.u32 %v644, 7
    %v646 = vsub.s32 0, %v645
    %v647 = vrot.slane %v607, %v646
    %v648 = vlaneseq
    %v649 = vshrl.u32 %v648, 7
    %v650 = vsub.s32 0, %v649
    %v651 = vrot.slane %v611, %v650
    %v652 = vlaneseq
    %v653 = vshrl.u32 %v652, 7
    %v654 = vsub.s32 0, %v653
    %v655 = vrot.slane %v615, %v654
    %v656 = vlaneseq
    %v657 = vshrl.u32 %v656, 7
    %v658 = vsub.s32 0, %v657
    %v659 = vrot.slane %v619, %v658
    %v660 = vsub.f32 %v124, %v631
    %v661 = vsub.f32 %v125, %v635
    %v662 = vsub.f32 %v126, %v639
    %v663 = vsub.f32 %v127, %v643
    %v664 = vsub.f32 %v128, %v647
    %v665 = vsub.f32 %v129, %v651
    %v666 = vsub.f32 %v130, %v655
    %v667 = vsub.f32 %v131, %v659
    %668 = vst [vmem:[#allocation9] sm:$0xf] %v279
    %669 = vst [vmem:[#allocation9 + $0x8] sm:$0xf] %v281
    %670 = vst [vmem:[#allocation9 + $0x10] sm:$0xf] %v283
    %671 = vst [vmem:[#allocation9 + $0x18] sm:$0xf] %v285
    %672 = vst [vmem:[#allocation9 + $0x20] sm:$0xf] %v287
    %673 = vst [vmem:[#allocation9 + $0x28] sm:$0xf] %v289
    %674 = vst [vmem:[#allocation9 + $0x30] sm:$0xf] %v291
    %675 = vst [vmem:[#allocation9 + $0x38] sm:$0xf] %v293
    %v684 = vrot.slane %v124, 4
    %v685 = vrot.slane %v125, 4
    %v686 = vrot.slane %v126, 4
    %v687 = vrot.slane %v127, 4
    %v688 = vrot.slane %v128, 4
    %v689 = vrot.slane %v129, 4
    %v690 = vrot.slane %v130, 4
    %v691 = vrot.slane %v131, 4
    %700 = vst [vmem:[#allocation9] sm:$0xf0] %v684
    %701 = vst [vmem:[#allocation9 + $0x8] sm:$0xf0] %v685
    %702 = vst [vmem:[#allocation9 + $0x10] sm:$0xf0] %v686
    %703 = vst [vmem:[#allocation9 + $0x18] sm:$0xf0] %v687
    %704 = vst [vmem:[#allocation9 + $0x20] sm:$0xf0] %v688
    %705 = vst [vmem:[#allocation9 + $0x28] sm:$0xf0] %v689
    %706 = vst [vmem:[#allocation9 + $0x30] sm:$0xf0] %v690
    %707 = vst [vmem:[#allocation9 + $0x38] sm:$0xf0] %v691
    %708 = vst [vmem:[#allocation9 + $0x40] sm:$0xf] %v660
    %709 = vst [vmem:[#allocation9 + $0x48] sm:$0xf] %v661
    %710 = vst [vmem:[#allocation9 + $0x50] sm:$0xf] %v662
    %711 = vst [vmem:[#allocation9 + $0x58] sm:$0xf] %v663
    %712 = vst [vmem:[#allocation9 + $0x60] sm:$0xf] %v664
    %713 = vst [vmem:[#allocation9 + $0x68] sm:$0xf] %v665
    %714 = vst [vmem:[#allocation9 + $0x70] sm:$0xf] %v666
    %715 = vst [vmem:[#allocation9 + $0x78] sm:$0xf] %v667
    // Predicated region
    $region26: #{tpu_custom_call.1} parent=1 // pred_check
      _
    $region27: #{tpu_custom_call.1} parent=1 // pred_check_branch
      %717 = sbr.rel (0) target = $region29
    $region28: #{tpu_custom_call.1} parent=1 // pred_region
      %s719 = ssub.s32 2048, 2048
      %720 = vsyncadd [#allocation4], %s719
      %s721 = sshll.u32 [#allocation9], 4
      %s722 = int_to_ptr.vmem [resolvable:$true] %s721
      %727 = dma.vmem_to_hbm [thread:$0]  %s722, 2048, %s3, [#allocation4], 1024, 1024, 64
    $region29: #{tpu_custom_call.1} parent=1 // pred_fallthru
      _
    // Predicated region
    $region30: #{tpu_custom_call.1} parent=1 // pred_check
      _
    $region31: #{tpu_custom_call.1} parent=1 // pred_check_branch
      %729 = sbr.rel (0) target = $region33
    $region32: #{tpu_custom_call.1} parent=1 // pred_region
      %s731 = ssub.s32 128, 128
      %732 = vsyncadd [#allocation11], %s731
      %s734 = sshll.u32 [#allocation10], 4
      %s735 = int_to_ptr.vmem [resolvable:$true] %s734
      %737 = dma.vmem_to_hbm [thread:$0]  %s735, 128, %s4, [#allocation11]
    $region33: #{tpu_custom_call.1} parent=1 // pred_fallthru
      _
    // Predicated region
    $region34: #{tpu_custom_call.1} parent=1 // pred_check
      _
    $region35: #{tpu_custom_call.1} parent=1 // pred_check_branch
      %739 = sbr.rel (0) target = $region37
    $region36: #{tpu_custom_call.1} parent=1 // pred_region
      %740 = dma.done [#allocation4], 2048
    $region37: #{tpu_custom_call.1} parent=1 // pred_fallthru
      _
    // Predicated region
    $region38: #{tpu_custom_call.1} parent=1 // pred_check
      _
    $region39: #{tpu_custom_call.1} parent=1 // pred_check_branch
      %742 = sbr.rel (0) target = $region41
    $region40: #{tpu_custom_call.1} parent=1 // pred_region
      %743 = dma.done [#allocation11], 128
    $region41: #{tpu_custom_call.1} parent=1 // pred_fallthru
      _
    %744 = vsyncpa [#allocation3], 1
    %745 = vsyncpa [#allocation8], 1
    %746 = vsyncpa [#allocation4], 1
    %747 = vsyncpa [#allocation11], 1
    %748 = vsyncpa [#allocation5], 1

</llo_original>
